<compile_context>
chip_gen: v6e
topology: v6e:2x2x1
jax: 0.10.0
libtpu: 0.0.40
codegen_flags: <defaults>
</compile_context>

<pallas_src>
import functools

import jax
import jax.numpy as jnp
from jax.experimental import pallas as pl
from jax.experimental.pallas import tpu as pltpu

_LANE = 128          # lane (last-dim) granule
_SUBLANE_BF16 = 16   # sublane granule for bf16 rows


def _round_up(x, m):
    return ((x + m - 1) // m) * m


def _use_bf16_epilogue():
    # v6e / v7x have bf16 VPU/EUP paths; v2-v5 do not -> keep the epilogue in f32 there.
    try:
        kind = jax.devices()[0].device_kind.lower()
    except Exception:
        return False
    return not any(tag in kind for tag in ("v2", "v3", "v4", "v5"))


# ---------------------------------------------------------------------------
# Pallas kernel: fused multi-layer GCN
#   h_0 = X ;  for l: h_{l+1} = tanh( A_norm @ (h_l @ W_l) + b_l )   (last layer: no act)
# A_norm is manually DMA'd into VMEM (overlapped with layer-0 X@W) and stays resident
# across all layers; matmuls are bf16-in / f32-accumulate on the MXU.
# ---------------------------------------------------------------------------
def _fused_gcn_kernel(a_hbm, x_ref, w_ref, b_ref, o_ref, a_vmem, a_sem, *,
                      num_layers, bf16_epilogue):
    # Start A's HBM->VMEM DMA; overlap it with the layer-0 feature transform.
    cp = pltpu.make_async_copy(a_hbm, a_vmem, a_sem)
    cp.start()
    h = x_ref[...]                                                  # [Np, Fp] bf16
    xw = jnp.dot(h, w_ref[0], preferred_element_type=jnp.float32)   # layer-0 X@W (MXU), no A needed
    cp.wait()
    a = a_vmem[...]                                                  # [Np, Np] bf16, resident for all layers

    for layer in range(num_layers):                                  # static unroll (num_layers small)
        if layer > 0:
            xw = jnp.dot(h, w_ref[layer], preferred_element_type=jnp.float32)
        # Neighborhood aggregation with the dense normalized adjacency (MXU).
        out = jnp.dot(a, xw.astype(jnp.bfloat16), preferred_element_type=jnp.float32)
        out = out + b_ref[layer]                                     # bias add in f32 accumulator dtype
        if layer < num_layers - 1:
            if bf16_epilogue:
                h = jnp.tanh(out.astype(jnp.bfloat16))               # bf16 EUP (v6e/v7x)
            else:
                h = jnp.tanh(out).astype(jnp.bfloat16)               # f32 EUP (v5e), single cast after
            # TODO(synk): F.dropout with training=True not implemented; eval mode -> identity.
        else:
            o_ref[...] = out.astype(o_ref.dtype)                     # lane-dense f32 store (Fp % 128 == 0)


def _vmem_limit_bytes(n_pad, f_pad, num_layers):
    a_scratch = 2 * n_pad * n_pad                       # resident A (bf16)
    x_in = 2 * 2 * n_pad * f_pad                        # bf16 X (buffered)
    w_in = 2 * 2 * num_layers * f_pad * f_pad           # bf16 W stack
    b_in = 2 * 4 * num_layers * f_pad                   # f32 b stack
    out = 2 * 4 * n_pad * f_pad                         # f32 output
    interm = 3 * 4 * n_pad * f_pad                      # f32 xw / out + bf16 h live values
    needed = a_scratch + x_in + w_in + b_in + out + interm
    # Clamp to a value valid on every generation (v7x physical VMEM is 64 MiB);
    # on v5e/v6e this could be raised toward 128 MiB for bigger graphs.
    return int(max(16 << 20, min(64 << 20, 2 * needed + (4 << 20))))


def fused_gcn_forward(a_bf16, x_bf16, w_stack, b_stack, num_layers, bf16_epilogue):
    n_pad = a_bf16.shape[0]
    f_pad = w_stack.shape[-1]
    kernel = functools.partial(_fused_gcn_kernel, num_layers=num_layers,
                               bf16_epilogue=bf16_epilogue)
    return pl.pallas_call(
        kernel,
        out_shape=jax.ShapeDtypeStruct((n_pad, f_pad), jnp.float32),
        in_specs=[
            pl.BlockSpec(memory_space=pl.ANY),                  # A_norm stays in HBM; manual DMA
            pl.BlockSpec(memory_space=pltpu.MemorySpace.VMEM),  # X       [Np, Fp] bf16
            pl.BlockSpec(memory_space=pltpu.MemorySpace.VMEM),  # W stack [L, Fp, Fp] bf16
            pl.BlockSpec(memory_space=pltpu.MemorySpace.VMEM),  # b stack [L, 1, Fp] f32
        ],
        out_specs=pl.BlockSpec(memory_space=pltpu.MemorySpace.VMEM),
        scratch_shapes=[
            pltpu.VMEM((n_pad, n_pad), jnp.bfloat16),           # resident A copy
            pltpu.SemaphoreType.DMA(()),
        ],
        compiler_params=pltpu.CompilerParams(
            vmem_limit_bytes=_vmem_limit_bytes(n_pad, f_pad, num_layers)),
    )(a_bf16, x_bf16, w_stack, b_stack)


# ---------------------------------------------------------------------------
# Glue: dense GCN-normalized adjacency (PyG gcn_norm semantics).
# ---------------------------------------------------------------------------
def build_normalized_adjacency(edge_index, num_nodes):
    src, dst = edge_index[0], edge_index[1]
    a = jnp.zeros((num_nodes, num_nodes), jnp.float32).at[dst, src].add(1.0)  # duplicate edges sum
    diag = jnp.diagonal(a)
    a = a + jnp.diag(jnp.where(diag > 0.0, 0.0, 1.0))                         # add self-loops only where missing
    deg = a.sum(axis=1)
    dinv = jnp.where(deg > 0.0, jax.lax.rsqrt(deg), 0.0)
    return dinv[:, None] * a * dinv[None, :]                                  # D^-1/2 (A+I) D^-1/2


@functools.partial(jax.jit,
                   static_argnames=("n_pad", "f_pad", "num_layers", "bf16_epilogue"))
def _gcn_forward_padded(x, edge_index, w_stack, b_stack, *, n_pad, f_pad,
                        num_layers, bf16_epilogue):
    # Adjacency build + padding fused into the same jit as the kernel call so the
    # wrapper does not materialize extra N^2 f32 arrays in HBM.
    # TODO(synk): cache A_norm across calls when edge_index is static between calls.
    n, f_in = x.shape
    a = build_normalized_adjacency(edge_index, n)
    a_pad = jnp.zeros((n_pad, n_pad), jnp.bfloat16).at[:n, :n].set(a.astype(jnp.bfloat16))
    x_pad = jnp.zeros((n_pad, f_pad), jnp.bfloat16).at[:n, :f_in].set(x.astype(jnp.bfloat16))
    return fused_gcn_forward(a_pad, x_pad, w_stack, b_stack, num_layers, bf16_epilogue)


# ---------------------------------------------------------------------------
# FwGNN wrapper: padded parameter setup + one fused Pallas call for all GCN layers.
# ---------------------------------------------------------------------------
class FwGNNPallas:
    def __init__(self, num_layers, node_feat_dim, num_hid, num_out, key):
        self.num_layers = num_layers
        self.node_feat_dim = node_feat_dim
        self.num_out = num_out
        self.f_pad = _round_up(max(node_feat_dim, num_hid, num_out), _LANE)
        self.bf16_epilogue = _use_bf16_epilogue()

        ws, bs = [], []
        for layer in range(num_layers):
            fin = node_feat_dim if layer == 0 else num_hid
            fout = num_out if layer == num_layers - 1 else num_hid
            key, wk = jax.random.split(key)
            limit = (6.0 / (fin + fout)) ** 0.5          # Glorot-uniform (GCNConv default)
            w = jax.random.uniform(wk, (fin, fout), jnp.float32, -limit, limit)
            b = jnp.zeros((fout,), jnp.float32)          # bias init to zeros
            w_pad = jnp.zeros((self.f_pad, self.f_pad), jnp.float32).at[:fin, :fout].set(w)
            b_pad = jnp.zeros((1, self.f_pad), jnp.float32).at[0, :fout].set(b)
            ws.append(w_pad)
            bs.append(b_pad)
        self.w_stack = jnp.stack(ws).astype(jnp.bfloat16)   # [L, Fp, Fp] bf16 (MXU)
        self.b_stack = jnp.stack(bs)                         # [L, 1, Fp] f32 (epilogue)
        self.w_f32 = jnp.stack(ws)                            # for the pure-JAX reference
        self.b_f32 = jnp.stack(bs)

    def __call__(self, x, edge_index, x_batch, edge_attr=None):
        # x_batch / edge_attr unused in the reference forward (GCN path).
        n = x.shape[0]
        n_pad = max(_round_up(n, _SUBLANE_BF16), _SUBLANE_BF16)   # rows: bf16 sublane granule only
        out_pad = _gcn_forward_padded(
            x, edge_index, self.w_stack, self.b_stack,
            n_pad=n_pad, f_pad=self.f_pad,
            num_layers=self.num_layers, bf16_epilogue=self.bf16_epilogue)
        return out_pad[:n, :self.num_out]

    # Pure-JAX f32 reference (correctness checking only).
    def reference(self, x, edge_index):
        n = x.shape[0]
        a = build_normalized_adjacency(edge_index, n)
        h = x
        for layer in range(self.num_layers):
            fin = h.shape[1]
            w = self.w_f32[layer, :fin, :]
            b = self.b_f32[layer, 0, :]
            h = a @ (h @ w) + b[None, :]
            if layer < self.num_layers - 1:
                h = jnp.tanh(h)
        return h[:, :self.num_out]


# ---------------------------------------------------------------------------
# FwCSModel wrapper: returns (gnn(x), mask) like the PyTorch module.
# ---------------------------------------------------------------------------
class FwCSModelPallas:
    def __init__(self, num_layers, node_feat_dim, num_hid, num_out, key):
        self.gnn = FwGNNPallas(num_layers, node_feat_dim, num_hid, num_out, key)

    def __call__(self, batch):
        x_hid = self.gnn(batch["x"], batch["edge_index"], batch["batch"],
                         batch.get("edge_attr"))
        return x_hid, batch["mask"]


# ---------------------------------------------------------------------------
if __name__ == "__main__":
    key = jax.random.PRNGKey(0)

    # Small, forward-consistent shapes.
    num_nodes = 64
    node_feat_dim = 16
    num_hid = 32
    num_out = 16
    num_layers = 3
    num_edges = 128

    k_x, k_src, k_dst, k_params = jax.random.split(key, 4)
    x = jax.random.normal(k_x, (num_nodes, node_feat_dim), jnp.float32)
    src = jax.random.randint(k_src, (num_edges,), 0, num_nodes, jnp.int32)
    dst = jax.random.randint(k_dst, (num_edges,), 0, num_nodes, jnp.int32)
    edge_index = jnp.stack([src, dst], axis=0)            # [2, E]
    x_batch = jnp.zeros((num_nodes,), jnp.int32)          # single graph
    mask = jnp.ones((num_nodes,), jnp.bool_)

    model = FwCSModelPallas(num_layers, node_feat_dim, num_hid, num_out, k_params)
    batch = {"x": x, "edge_index": edge_index, "batch": x_batch,
             "edge_attr": None, "mask": mask}

    x_hid, out_mask = model(batch)
    x_hid = jax.block_until_ready(x_hid)

    assert x_hid.shape == (num_nodes, num_out), x_hid.shape
    assert out_mask.shape == (num_nodes,)
    assert bool(jnp.all(jnp.isfinite(x_hid)))

    # Numerical sanity vs pure-JAX f32 reference (bf16 MXU inputs -> loose tolerance).
    ref = model.gnn.reference(x, edge_index)
    max_err = float(jnp.max(jnp.abs(x_hid - ref)))
    assert max_err < 0.1, f"max abs err {max_err}"

    print("KERNEL_OK")
</pallas_src>

<mosaic_0001>
module attributes {stable_mosaic.version = 11 : i64} {
  func.func private @main(%arg0: i32) attributes {dimension_semantics = [#tpu.dimension_semantics<core_parallel>], iteration_bounds = array<i64: 2>, tpu.core_type = #tpu.core_type<sc_scalar_subcore>, window_params = []} {
    return
  }
}

module attributes {stable_mosaic.version = 11 : i64} {
  func.func private @main(%arg0: i32) attributes {dimension_semantics = [#tpu.dimension_semantics<core_parallel>], iteration_bounds = array<i64: 2>, tpu.core_type = #tpu.core_type<sc_scalar_subcore>, window_params = []} {
    return
  }
}

module attributes {stable_mosaic.version = 11 : i64} {
  func.func @_fused_gcn_kernel(%arg0: memref<64x64xbf16, #tpu.memory_space<any>>, %arg1: memref<64x128xbf16, #tpu.memory_space<vmem>>, %arg2: memref<3x128x128xbf16, #tpu.memory_space<vmem>>, %arg3: memref<3x1x128xf32, #tpu.memory_space<vmem>>, %arg4: memref<64x128xf32, #tpu.memory_space<vmem>>, %arg5: memref<64x64xbf16, #tpu.memory_space<vmem>>, %arg6: memref<!tpu.dma_semaphore, #tpu.memory_space<semaphore_mem>>) attributes {dimension_semantics = [], scalar_prefetch = 0 : i64, scratch_operands = 2 : i64, tpu.core_type = #tpu.core_type<tc>} {
    tpu.enqueue_dma source(%arg0 : memref<64x64xbf16, #tpu.memory_space<any>>) target(%arg5 : memref<64x64xbf16, #tpu.memory_space<vmem>>) target_semaphore(%arg6 : memref<!tpu.dma_semaphore, #tpu.memory_space<semaphore_mem>>)
    %c0 = arith.constant 0 : index
    %c0_0 = arith.constant 0 : index
    %0 = vector.load %arg1[%c0, %c0_0] : memref<64x128xbf16, #tpu.memory_space<vmem>>, vector<64x128xbf16>
    %c0_1 = arith.constant 0 : index
    %c0_2 = arith.constant 0 : index
    %c0_3 = arith.constant 0 : index
    %1 = vector.load %arg2[%c0_1, %c0_2, %c0_3] : memref<3x128x128xbf16, #tpu.memory_space<vmem>>, vector<1x128x128xbf16>
    %2 = vector.shape_cast %1 : vector<1x128x128xbf16> to vector<128x128xbf16>
    %cst = arith.constant dense<0.000000e+00> : vector<64x128xf32>
    %3 = tpu.matmul %0, %2, %cst {dimension_numbers = #tpu.dot_dimension_numbers<[1], [0], [0], [1], [0, 0, 1, 1], [], []>} : vector<64x128xbf16>, vector<128x128xbf16>, vector<64x128xf32> -> vector<64x128xf32>
    tpu.wait_dma2 semaphore(%arg6 : memref<!tpu.dma_semaphore, #tpu.memory_space<semaphore_mem>>) src(%arg0 : memref<64x64xbf16, #tpu.memory_space<any>>) dst(%arg5 : memref<64x64xbf16, #tpu.memory_space<vmem>>)
    %c0_4 = arith.constant 0 : index
    %c0_5 = arith.constant 0 : index
    %4 = vector.load %arg5[%c0_4, %c0_5] : memref<64x64xbf16, #tpu.memory_space<vmem>>, vector<64x64xbf16>
    %5 = arith.truncf %3 : vector<64x128xf32> to vector<64x128xbf16>
    %cst_6 = arith.constant dense<0.000000e+00> : vector<64x128xf32>
    %6 = tpu.matmul %4, %5, %cst_6 {dimension_numbers = #tpu.dot_dimension_numbers<[1], [0], [0], [1], [0, 0, 1, 1], [], []>} : vector<64x64xbf16>, vector<64x128xbf16>, vector<64x128xf32> -> vector<64x128xf32>
    %c0_7 = arith.constant 0 : index
    %c0_8 = arith.constant 0 : index
    %c0_9 = arith.constant 0 : index
    %7 = vector.load %arg3[%c0_7, %c0_8, %c0_9] : memref<3x1x128xf32, #tpu.memory_space<vmem>>, vector<1x1x128xf32>
    %8 = vector.shape_cast %7 : vector<1x1x128xf32> to vector<1x128xf32>
    %9 = vector.broadcast %8 : vector<1x128xf32> to vector<64x128xf32>
    %10 = arith.addf %6, %9 : vector<64x128xf32>
    %11 = arith.truncf %10 : vector<64x128xf32> to vector<64x128xbf16>
    %12 = math.tanh %11 : vector<64x128xbf16>
    %c1 = arith.constant 1 : index
    %c0_10 = arith.constant 0 : index
    %c0_11 = arith.constant 0 : index
    %13 = vector.load %arg2[%c1, %c0_10, %c0_11] : memref<3x128x128xbf16, #tpu.memory_space<vmem>>, vector<1x128x128xbf16>
    %14 = vector.shape_cast %13 : vector<1x128x128xbf16> to vector<128x128xbf16>
    %cst_12 = arith.constant dense<0.000000e+00> : vector<64x128xf32>
    %15 = tpu.matmul %12, %14, %cst_12 {dimension_numbers = #tpu.dot_dimension_numbers<[1], [0], [0], [1], [0, 0, 1, 1], [], []>} : vector<64x128xbf16>, vector<128x128xbf16>, vector<64x128xf32> -> vector<64x128xf32>
    %16 = arith.truncf %15 : vector<64x128xf32> to vector<64x128xbf16>
    %cst_13 = arith.constant dense<0.000000e+00> : vector<64x128xf32>
    %17 = tpu.matmul %4, %16, %cst_13 {dimension_numbers = #tpu.dot_dimension_numbers<[1], [0], [0], [1], [0, 0, 1, 1], [], []>} : vector<64x64xbf16>, vector<64x128xbf16>, vector<64x128xf32> -> vector<64x128xf32>
    %c1_14 = arith.constant 1 : index
    %c0_15 = arith.constant 0 : index
    %c0_16 = arith.constant 0 : index
    %18 = vector.load %arg3[%c1_14, %c0_15, %c0_16] : memref<3x1x128xf32, #tpu.memory_space<vmem>>, vector<1x1x128xf32>
    %19 = vector.shape_cast %18 : vector<1x1x128xf32> to vector<1x128xf32>
    %20 = vector.broadcast %19 : vector<1x128xf32> to vector<64x128xf32>
    %21 = arith.addf %17, %20 : vector<64x128xf32>
    %22 = arith.truncf %21 : vector<64x128xf32> to vector<64x128xbf16>
    %23 = math.tanh %22 : vector<64x128xbf16>
    %c2 = arith.constant 2 : index
    %c0_17 = arith.constant 0 : index
    %c0_18 = arith.constant 0 : index
    %24 = vector.load %arg2[%c2, %c0_17, %c0_18] : memref<3x128x128xbf16, #tpu.memory_space<vmem>>, vector<1x128x128xbf16>
    %25 = vector.shape_cast %24 : vector<1x128x128xbf16> to vector<128x128xbf16>
    %cst_19 = arith.constant dense<0.000000e+00> : vector<64x128xf32>
    %26 = tpu.matmul %23, %25, %cst_19 {dimension_numbers = #tpu.dot_dimension_numbers<[1], [0], [0], [1], [0, 0, 1, 1], [], []>} : vector<64x128xbf16>, vector<128x128xbf16>, vector<64x128xf32> -> vector<64x128xf32>
    %27 = arith.truncf %26 : vector<64x128xf32> to vector<64x128xbf16>
    %cst_20 = arith.constant dense<0.000000e+00> : vector<64x128xf32>
    %28 = tpu.matmul %4, %27, %cst_20 {dimension_numbers = #tpu.dot_dimension_numbers<[1], [0], [0], [1], [0, 0, 1, 1], [], []>} : vector<64x64xbf16>, vector<64x128xbf16>, vector<64x128xf32> -> vector<64x128xf32>
    %c2_21 = arith.constant 2 : index
    %c0_22 = arith.constant 0 : index
    %c0_23 = arith.constant 0 : index
    %29 = vector.load %arg3[%c2_21, %c0_22, %c0_23] : memref<3x1x128xf32, #tpu.memory_space<vmem>>, vector<1x1x128xf32>
    %30 = vector.shape_cast %29 : vector<1x1x128xf32> to vector<1x128xf32>
    %31 = vector.broadcast %30 : vector<1x128xf32> to vector<64x128xf32>
    %32 = arith.addf %28, %31 : vector<64x128xf32>
    %c0_24 = arith.constant 0 : index
    %c0_25 = arith.constant 0 : index
    %33 = vector.load %arg4[%c0_24, %c0_25] : memref<64x128xf32, #tpu.memory_space<vmem>>, vector<64x128xf32>
    tpu.vector_store %arg4[%c0_24, %c0_25], %32 {strides = array<i32>} : memref<64x128xf32, #tpu.memory_space<vmem>>, vector<64x128xf32>,
    return
  }
}

</mosaic_0001>

<llo_original>
// kernel: _gcn_forward_padded.1
$region0: #{_gcn_forward_padded.1}
  #allocation0 [shape = 'u32[]', space=smem, size = 0x4, offset = 0x4, fixed_abs, tag = 'smem constant byte address 0x4 - core index']
  #allocation1 [shape = 'u32[144,128]{1,0:T(1,128)}', space=vmem, size = 0x12000, scoped, tag = 'internal scratch']
  #allocation2 [shape = 'bf16[64,64]{1,0:T(8,128)(2,1)}', space=vmem, size = 0x4000, scoped, tag = 'scratch operand']
  #allocation3 [shape = 's32[1]{0}', space=sflag, size = 0x4, scoped, tag = 'scratch operand']
  #allocation6 [shape = 's32[]', space=sflag, size = 0x4, offset = 0, fixed_abs, tag = 'sflag constant byte address 0x0 - dummy sync flag']
  %s0 = inlined_call_operand.vmem [shape: bf16[64,64], index: 0, kind: input, shape index: {}]
  %s1 = inlined_call_operand.vmem [shape: bf16[64,128], index: 1, kind: input, shape index: {}]
  %s2 = inlined_call_operand.vmem [shape: bf16[3,128,128], index: 2, kind: input, shape index: {}]
  %s3 = inlined_call_operand.vmem [shape: f32[3,1,128], index: 3, kind: input, shape index: {}]
  %s4 = inlined_call_operand.hbm [shape: f32[64,128], index: 4, kind: output, shape index: {}]
  %s5 = sld [smem:[#allocation0]]
  $region56: #{_gcn_forward_padded.1} parent=0
    _
  %s7 = ssub.s32 1, %s5
  %s8 = scalar_select 0, %s7, %s5
  $region1: #{_gcn_forward_padded.1} parent=0
    #allocation4 [shape = 'u8[32768]{0}', space=vmem, size = 0x8000, scoped, tag = 'output window, operand 0, single buffered']
    #allocation5 [shape = 's32[1]{0}', space=sflag, size = 0x4, scoped, tag = 'scoped memory for _gcn_forward_padded.1']
    %9 = vsyncpa [#allocation5], 0
    // Predicated region
    $region2: #{_gcn_forward_padded.1} parent=1 // pred_check
      _
    $region3: #{_gcn_forward_padded.1} parent=1 // pred_check_branch
      %11 = sbr.rel (0) target = $region5
    $region4: #{_gcn_forward_padded.1} parent=1 // pred_region
      _
    $region5: #{_gcn_forward_padded.1} parent=1 // pred_fallthru
      _
    // Predicated region
    $region6: #{_gcn_forward_padded.1} parent=1 // pred_check
      _
    $region7: #{_gcn_forward_padded.1} parent=1 // pred_check_branch
      %13 = sbr.rel (0) target = $region9
    $region8: #{_gcn_forward_padded.1} parent=1 // pred_region
      _
    $region9: #{_gcn_forward_padded.1} parent=1 // pred_fallthru
      _
    // Predicated region
    $region10: #{_gcn_forward_padded.1} parent=1 // pred_check
      _
    $region11: #{_gcn_forward_padded.1} parent=1 // pred_check_branch
      %15 = sbr.rel (0) target = $region13
    $region12: #{_gcn_forward_padded.1} parent=1 // pred_region
      _
    $region13: #{_gcn_forward_padded.1} parent=1 // pred_fallthru
      _
    %p18 = scmp.lt.u32.totalorder 32, 8
    %p19 = pneg %p18
    // Predicated region
    $region14: #{_gcn_forward_padded.1} parent=1 // pred_check
      _
    $region15: #{_gcn_forward_padded.1} parent=1 // pred_check_branch
      %21 = sbr.rel (%p18) target = $region17
    $region16: #{_gcn_forward_padded.1} parent=1 // pred_region
      %s37 = sand.u32 32, 7
      %p38 = scmp.eq.s32.totalorder %s37, 0
      // Predicated region
      $region29: #{_gcn_forward_padded.1} parent=16 // pred_check
        %p39 = pneg %p38
      $region30: #{_gcn_forward_padded.1} parent=16 // pred_check_branch
        %41 = sbr.rel (%p39) target = $region32
      $region31: #{_gcn_forward_padded.1} parent=16 // pred_region
        loop: start=0, step=1, limit=1
        $region33: #{_gcn_forward_padded.1} parent=31 // loop_pre_header
          _
        $region34: #{_gcn_forward_padded.1} parent=31 // loop_header
          %s43 = sphi 0, %s47
          %p44 = scmp.ge.s32.totalorder %s43, 1
          %s48 = sphi %s0, %s0
          %s49 = sphi [#allocation2], [#allocation2]
        $region35: #{_gcn_forward_padded.1} parent=31 // loop_header_branch
          %46 = sbr.rel (%p44) target = $region39
        $region36: #{_gcn_forward_padded.1} parent=31 // loop_body
          %v50 = vld [vmem:[%s48] sm:$0xff]
          %51 = vst [vmem:[%s49] sm:$0xff] %v50
          %v52 = vld [vmem:[%s48 + $0x8] sm:$0xff]
          %53 = vst [vmem:[%s49 + $0x8] sm:$0xff] %v52
          %v54 = vld [vmem:[%s48 + $0x10] sm:$0xff]
          %55 = vst [vmem:[%s49 + $0x10] sm:$0xff] %v54
          %v56 = vld [vmem:[%s48 + $0x18] sm:$0xff]
          %57 = vst [vmem:[%s49 + $0x18] sm:$0xff] %v56
        $region37: #{_gcn_forward_padded.1} parent=31 // loop_footer
          %s47 = sadd.s32 1, %s43
        $region38: #{_gcn_forward_padded.1} parent=31 // loop_footer_branch
          %42 = sbr.rel target = $region34
        $region39: #{_gcn_forward_padded.1} parent=31 // loop_exit
          _
      $region32: #{_gcn_forward_padded.1} parent=16 // pred_fallthru
        _
      %p58 = pneg %p38
      // Predicated region
      $region40: #{_gcn_forward_padded.1} parent=16 // pred_check
        _
      $region41: #{_gcn_forward_padded.1} parent=16 // pred_check_branch
        %60 = sbr.rel (%p38) target = $region43
      $region42: #{_gcn_forward_padded.1} parent=16 // pred_region
        %s61 = sand.u32 32, 7
      $region43: #{_gcn_forward_padded.1} parent=16 // pred_fallthru
        _
    $region17: #{_gcn_forward_padded.1} parent=1 // pred_fallthru
      _
    // Predicated region
    $region18: #{_gcn_forward_padded.1} parent=1 // pred_check
      %p22 = pneg %p18
    $region19: #{_gcn_forward_padded.1} parent=1 // pred_check_branch
      %24 = sbr.rel (%p22) target = $region21
    $region20: #{_gcn_forward_padded.1} parent=1 // pred_region
      %s25 = sshll.u32 1, 32
      %s26 = ssub.s32 %s25, 1
      loop: start=0, step=1, limit=1
      $region22: #{_gcn_forward_padded.1} parent=20 // loop_pre_header
        _
      $region23: #{_gcn_forward_padded.1} parent=20 // loop_header
        %s28 = sphi 0, %s32
        %p29 = scmp.ge.s32.totalorder %s28, 1
        %s33 = sphi %s0, %s0
        %s34 = sphi [#allocation2], [#allocation2]
      $region24: #{_gcn_forward_padded.1} parent=20 // loop_header_branch
        %31 = sbr.rel (%p29) target = $region28
      $region25: #{_gcn_forward_padded.1} parent=20 // loop_body
        %v35 = vld [vmem:[%s33] sm:%s26]
        %36 = vst [vmem:[%s34] sm:%s26] %v35
      $region26: #{_gcn_forward_padded.1} parent=20 // loop_footer
        %s32 = sadd.s32 1, %s28
      $region27: #{_gcn_forward_padded.1} parent=20 // loop_footer_branch
        %27 = sbr.rel target = $region23
      $region28: #{_gcn_forward_padded.1} parent=20 // loop_exit
        _
    $region21: #{_gcn_forward_padded.1} parent=1 // pred_fallthru
      _
    // Predicated region
    $region44: #{_gcn_forward_padded.1} parent=1 // pred_check
      _
    $region45: #{_gcn_forward_padded.1} parent=1 // pred_check_branch
      %64 = sbr.rel (0) target = $region47
    $region46: #{_gcn_forward_padded.1} parent=1 // pred_region
      %65 = vsyncadd [#allocation3], 512
    $region47: #{_gcn_forward_padded.1} parent=1 // pred_fallthru
      _
    %v66 = vld [vmem:[%s1] sm:$0xf]
    %v67 = vld [vmem:[%s1 + $0x4] sm:$0xf]
    %v68 = vld [vmem:[%s1 + $0x8] sm:$0xf]
    %v69 = vld [vmem:[%s1 + $0xc] sm:$0xf]
    %v70 = vld [vmem:[%s1 + $0x10] sm:$0xf]
    %v71 = vld [vmem:[%s1 + $0x14] sm:$0xf]
    %v72 = vld [vmem:[%s1 + $0x18] sm:$0xf]
    %v73 = vld [vmem:[%s1 + $0x1c] sm:$0xf]
    %v74 = vld [vmem:[%s2] sm:$0xf]
    %v75 = vld [vmem:[%s2 + $0x4] sm:$0xf]
    %v76 = vld [vmem:[%s2 + $0x8] sm:$0xf]
    %v77 = vld [vmem:[%s2 + $0xc] sm:$0xf]
    %v78 = vld [vmem:[%s2 + $0x10] sm:$0xf]
    %v79 = vld [vmem:[%s2 + $0x14] sm:$0xf]
    %v80 = vld [vmem:[%s2 + $0x18] sm:$0xf]
    %v81 = vld [vmem:[%s2 + $0x1c] sm:$0xf]
    %v82 = vld [vmem:[%s2 + $0x20] sm:$0xf]
    %v83 = vld [vmem:[%s2 + $0x24] sm:$0xf]
    %v84 = vld [vmem:[%s2 + $0x28] sm:$0xf]
    %v85 = vld [vmem:[%s2 + $0x2c] sm:$0xf]
    %v86 = vld [vmem:[%s2 + $0x30] sm:$0xf]
    %v87 = vld [vmem:[%s2 + $0x34] sm:$0xf]
    %v88 = vld [vmem:[%s2 + $0x38] sm:$0xf]
    %v89 = vld [vmem:[%s2 + $0x3c] sm:$0xf]
    %v98 = vunpack.c.l.b16 %v66
    %v99 = vunpack.c.l.b16 %v67
    %v100 = vunpack.c.l.b16 %v68
    %v101 = vunpack.c.l.b16 %v69
    %v102 = vunpack.c.l.b16 %v70
    %v103 = vunpack.c.l.b16 %v71
    %v104 = vunpack.c.l.b16 %v72
    %v105 = vunpack.c.l.b16 %v73
    %v106 = vpack.c.b16 %v99, %v98
    %v107 = vpack.c.b16 %v101, %v100
    %v108 = vpack.c.b16 %v103, %v102
    %v109 = vpack.c.b16 %v105, %v104
    %v130 = vunpack.c.l.b16 %v74
    %v131 = vunpack.c.l.b16 %v75
    %v132 = vunpack.c.l.b16 %v76
    %v133 = vunpack.c.l.b16 %v77
    %v134 = vunpack.c.l.b16 %v78
    %v135 = vunpack.c.l.b16 %v79
    %v136 = vunpack.c.l.b16 %v80
    %v137 = vunpack.c.l.b16 %v81
    %v138 = vunpack.c.l.b16 %v82
    %v139 = vunpack.c.l.b16 %v83
    %v140 = vunpack.c.l.b16 %v84
    %v141 = vunpack.c.l.b16 %v85
    %v142 = vunpack.c.l.b16 %v86
    %v143 = vunpack.c.l.b16 %v87
    %v144 = vunpack.c.l.b16 %v88
    %v145 = vunpack.c.l.b16 %v89
    %v146 = vpack.c.b16 %v131, %v130
    %v147 = vpack.c.b16 %v133, %v132
    %v148 = vpack.c.b16 %v135, %v134
    %v149 = vpack.c.b16 %v137, %v136
    %v150 = vpack.c.b16 %v139, %v138
    %v151 = vpack.c.b16 %v141, %v140
    %v152 = vpack.c.b16 %v143, %v142
    %v153 = vpack.c.b16 %v145, %v144
    %162 = vmatprep.subr.bf16.mxu0 0
    %163 = vmatpush1.bf16.msra.mxu0 %v153
    %164 = vmatprep.subr.bf16.mxu0 0
    %165 = vmatpush1.bf16.msra.mxu0 %v152
    %166 = vmatprep.subr.bf16.mxu0 0
    %167 = vmatpush1.bf16.msra.mxu0 %v151
    %168 = vmatprep.subr.bf16.mxu0 0
    %169 = vmatpush1.bf16.msra.mxu0 %v150
    %170 = vmatprep.subr.bf16.mxu0 0
    %171 = vmatpush1.bf16.msra.mxu0 %v149
    %172 = vmatprep.subr.bf16.mxu0 0
    %173 = vmatpush1.bf16.msra.mxu0 %v148
    %174 = vmatprep.subr.bf16.mxu0 0
    %175 = vmatpush1.bf16.msra.mxu0 %v147
    %176 = vmatprep.subr.bf16.mxu0 0
    %177 = vmatpush1.bf16.msra.mxu0 %v146
    %178 = vmatprep.subr.bf16.mxu0 0
    %179 = vmatpush2.bf16.msra.mxu0 0
    %180 = vmatprep.subr.bf16.mxu0 0
    %181 = vmatpush2.bf16.msra.mxu0 0
    %182 = vmatprep.subr.bf16.mxu0 0
    %183 = vmatpush2.bf16.msra.mxu0 0
    %184 = vmatprep.subr.bf16.mxu0 0
    %185 = vmatpush2.bf16.msra.mxu0 0
    %186 = vmatprep.subr.bf16.mxu0 0
    %187 = vmatpush2.bf16.msra.mxu0 0
    %188 = vmatprep.subr.bf16.mxu0 0
    %189 = vmatpush2.bf16.msra.mxu0 0
    %190 = vmatprep.subr.bf16.mxu0 0
    %191 = vmatpush2.bf16.msra.mxu0 0
    %192 = vmatprep.subr.bf16.mxu0 0
    %193 = vmatpush2.bf16.msra.mxu0 0
    %194 = vmatprep.mubr.bf16.mxu0 0
    %195 = vmatmul.mubr.bf16.gmra.mxu0 %v106
    %v196 = vpop.f32.mrf.mxu0
    %v197 = vadd.f32 0.0, %v196
    %v198 = vpop.f32.mrf.mxu0
    %v199 = vpop.f32.mrf.mxu0
    %v200 = vadd.f32 0.0, %v199
    %v201 = vpop.f32.mrf.mxu0
    %202 = vmatprep.mubr.bf16.mxu0 0
    %203 = vmatmul.mubr.bf16.gmra.mxu0 %v107
    %v204 = vpop.f32.mrf.mxu0
    %v205 = vadd.f32 0.0, %v204
    %v206 = vpop.f32.mrf.mxu0
    %v207 = vpop.f32.mrf.mxu0
    %v208 = vadd.f32 0.0, %v207
    %v209 = vpop.f32.mrf.mxu0
    %210 = vmatprep.mubr.bf16.mxu0 0
    %211 = vmatmul.mubr.bf16.gmra.mxu0 %v108
    %v212 = vpop.f32.mrf.mxu0
    %v213 = vadd.f32 0.0, %v212
    %v214 = vpop.f32.mrf.mxu0
    %v215 = vpop.f32.mrf.mxu0
    %v216 = vadd.f32 0.0, %v215
    %v217 = vpop.f32.mrf.mxu0
    %218 = vmatprep.mubr.bf16.mxu0 0
    %219 = vmatmul.mubr.bf16.gmra.mxu0 %v109
    %v220 = vpop.f32.mrf.mxu0
    %v221 = vadd.f32 0.0, %v220
    %v222 = vpop.f32.mrf.mxu0
    %v223 = vpop.f32.mrf.mxu0
    %v224 = vadd.f32 0.0, %v223
    %v225 = vpop.f32.mrf.mxu0
    %226 = vdwg.mxu0
    %s227 = smul.u32 4, 8
    %s228 = smul.u32 %s227, 1
    %s229 = sshll.u32 %s228, 4
    %230 = dma.done [#allocation3], %s229
    %v231 = vld [vmem:[#allocation2] sm:$0xf]
    %v232 = vld [vmem:[#allocation2 + $0x4] sm:$0xf]
    %v233 = vld [vmem:[#allocation2 + $0x8] sm:$0xf]
    %v234 = vld [vmem:[#allocation2 + $0xc] sm:$0xf]
    %v235 = vld [vmem:[#allocation2 + $0x10] sm:$0xf]
    %v236 = vld [vmem:[#allocation2 + $0x14] sm:$0xf]
    %v237 = vld [vmem:[#allocation2 + $0x18] sm:$0xf]
    %v238 = vld [vmem:[#allocation2 + $0x1c] sm:$0xf]
    %v239 = vpack.c.bf16 %v200, %v197
    %v240 = vpack.c.bf16 %v208, %v205
    %v241 = vpack.c.bf16 %v216, %v213
    %v242 = vpack.c.bf16 %v224, %v221
    %v243 = vld [vmem:[%s3] sm:$0x1]
    %v245 = vlaneseq
    %v246 = vshrl.u32 %v245, 7
    %v247 = vsub.s32 0, %v246
    %v248 = vrot.slane %v243, %v247
    %v258 = vunpack.c.l.b16 %v231
    %v259 = vunpack.c.l.b16 %v232
    %v260 = vunpack.c.l.b16 %v233
    %v261 = vunpack.c.l.b16 %v234
    %v262 = vunpack.c.l.b16 %v235
    %v263 = vunpack.c.l.b16 %v236
    %v264 = vunpack.c.l.b16 %v237
    %v265 = vunpack.c.l.b16 %v238
    %v266 = vpack.c.b16 %v259, %v258
    %v267 = vpack.c.b16 %v261, %v260
    %v268 = vpack.c.b16 %v263, %v262
    %v269 = vpack.c.b16 %v265, %v264
    %vm270 = vcmask 523264
    %v272 = vsel %vm270, %v266, 0
    %v275 = vsel %vm270, %v267, 0
    %v278 = vsel %vm270, %v268, 0
    %v281 = vsel %vm270, %v269, 0
    %283 = vmatprep.subr.bf16.mxu0 0
    %284 = vmatpush1.bf16.msra.mxu0 0
    %285 = vmatprep.subr.bf16.mxu0 0
    %286 = vmatpush1.bf16.msra.mxu0 0
    %287 = vmatprep.subr.bf16.mxu0 0
    %288 = vmatpush1.bf16.msra.mxu0 0
    %289 = vmatprep.subr.bf16.mxu0 0
    %290 = vmatpush1.bf16.msra.mxu0 0
    %291 = vmatprep.subr.bf16.mxu0 0
    %292 = vmatpush1.bf16.msra.mxu0 %v242
    %293 = vmatprep.subr.bf16.mxu0 0
    %294 = vmatpush1.bf16.msra.mxu0 %v241
    %295 = vmatprep.subr.bf16.mxu0 0
    %296 = vmatpush1.bf16.msra.mxu0 %v240
    %297 = vmatprep.subr.bf16.mxu0 0
    %298 = vmatpush1.bf16.msra.mxu0 %v239
    %299 = vmatprep.subr.bf16.mxu0 0
    %300 = vmatpush2.bf16.msra.mxu0 0
    %301 = vmatprep.subr.bf16.mxu0 0
    %302 = vmatpush2.bf16.msra.mxu0 0
    %303 = vmatprep.subr.bf16.mxu0 0
    %304 = vmatpush2.bf16.msra.mxu0 0
    %305 = vmatprep.subr.bf16.mxu0 0
    %306 = vmatpush2.bf16.msra.mxu0 0
    %307 = vmatprep.subr.bf16.mxu0 0
    %308 = vmatpush2.bf16.msra.mxu0 0
    %309 = vmatprep.subr.bf16.mxu0 0
    %310 = vmatpush2.bf16.msra.mxu0 0
    %311 = vmatprep.subr.bf16.mxu0 0
    %312 = vmatpush2.bf16.msra.mxu0 0
    %313 = vmatprep.subr.bf16.mxu0 0
    %314 = vmatpush2.bf16.msra.mxu0 0
    %315 = vmatprep.mubr.bf16.mxu0 0
    %316 = vmatmul.mubr.bf16.gmra.mxu0 %v272
    %v317 = vpop.f32.mrf.mxu0
    %v318 = vadd.f32 %v248, %v317
    %v319 = vpop.f32.mrf.mxu0
    %v320 = vpop.f32.mrf.mxu0
    %v321 = vadd.f32 %v248, %v320
    %v322 = vpop.f32.mrf.mxu0
    %323 = vmatprep.mubr.bf16.mxu0 0
    %324 = vmatmul.mubr.bf16.gmra.mxu0 %v275
    %v325 = vpop.f32.mrf.mxu0
    %v326 = vadd.f32 %v248, %v325
    %v327 = vpop.f32.mrf.mxu0
    %v328 = vpop.f32.mrf.mxu0
    %v329 = vadd.f32 %v248, %v328
    %v330 = vpop.f32.mrf.mxu0
    %331 = vmatprep.mubr.bf16.mxu0 0
    %332 = vmatmul.mubr.bf16.gmra.mxu0 %v278
    %v333 = vpop.f32.mrf.mxu0
    %v334 = vadd.f32 %v248, %v333
    %v335 = vpop.f32.mrf.mxu0
    %v336 = vpop.f32.mrf.mxu0
    %v337 = vadd.f32 %v248, %v336
    %v338 = vpop.f32.mrf.mxu0
    %339 = vmatprep.mubr.bf16.mxu0 0
    %340 = vmatmul.mubr.bf16.gmra.mxu0 %v281
    %v341 = vpop.f32.mrf.mxu0
    %v342 = vadd.f32 %v248, %v341
    %v343 = vpop.f32.mrf.mxu0
    %v344 = vpop.f32.mrf.mxu0
    %v345 = vadd.f32 %v248, %v344
    %v346 = vpop.f32.mrf.mxu0
    %347 = vdwg.mxu0
    %v348 = vpack.c.bf16 %v321, %v318
    %v349 = vpack.c.bf16 %v329, %v326
    %v350 = vpack.c.bf16 %v337, %v334
    %v351 = vpack.c.bf16 %v345, %v342
    %v352 = vtanh.bf16.pop %v348
    %v353 = vtanh.bf16.pop %v349
    %v354 = vtanh.bf16.pop %v350
    %v355 = vtanh.bf16.pop %v351
    %s356 = scalar_lea.vmem %s2, 64
    %v357 = vld [vmem:[%s356] sm:$0xf]
    %v358 = vld [vmem:[%s356 + $0x4] sm:$0xf]
    %v359 = vld [vmem:[%s356 + $0x8] sm:$0xf]
    %v360 = vld [vmem:[%s356 + $0xc] sm:$0xf]
    %v361 = vld [vmem:[%s356 + $0x10] sm:$0xf]
    %v362 = vld [vmem:[%s356 + $0x14] sm:$0xf]
    %v363 = vld [vmem:[%s356 + $0x18] sm:$0xf]
    %v364 = vld [vmem:[%s356 + $0x1c] sm:$0xf]
    %v365 = vld [vmem:[%s356 + $0x20] sm:$0xf]
    %v366 = vld [vmem:[%s356 + $0x24] sm:$0xf]
    %v367 = vld [vmem:[%s356 + $0x28] sm:$0xf]
    %v368 = vld [vmem:[%s356 + $0x2c] sm:$0xf]
    %v369 = vld [vmem:[%s356 + $0x30] sm:$0xf]
    %v370 = vld [vmem:[%s356 + $0x34] sm:$0xf]
    %v371 = vld [vmem:[%s356 + $0x38] sm:$0xf]
    %v372 = vld [vmem:[%s356 + $0x3c] sm:$0xf]
    %v389 = vunpack.c.l.b16 %v357
    %v390 = vunpack.c.l.b16 %v358
    %v391 = vunpack.c.l.b16 %v359
    %v392 = vunpack.c.l.b16 %v360
    %v393 = vunpack.c.l.b16 %v361
    %v394 = vunpack.c.l.b16 %v362
    %v395 = vunpack.c.l.b16 %v363
    %v396 = vunpack.c.l.b16 %v364
    %v397 = vunpack.c.l.b16 %v365
    %v398 = vunpack.c.l.b16 %v366
    %v399 = vunpack.c.l.b16 %v367
    %v400 = vunpack.c.l.b16 %v368
    %v401 = vunpack.c.l.b16 %v369
    %v402 = vunpack.c.l.b16 %v370
    %v403 = vunpack.c.l.b16 %v371
    %v404 = vunpack.c.l.b16 %v372
    %v405 = vpack.c.b16 %v390, %v389
    %v406 = vpack.c.b16 %v392, %v391
    %v407 = vpack.c.b16 %v394, %v393
    %v408 = vpack.c.b16 %v396, %v395
    %v409 = vpack.c.b16 %v398, %v397
    %v410 = vpack.c.b16 %v400, %v399
    %v411 = vpack.c.b16 %v402, %v401
    %v412 = vpack.c.b16 %v404, %v403
    %421 = vmatprep.subr.bf16.mxu0 0
    %422 = vmatpush1.bf16.msra.mxu0 %v412
    %423 = vmatprep.subr.bf16.mxu0 0
    %424 = vmatpush1.bf16.msra.mxu0 %v411
    %425 = vmatprep.subr.bf16.mxu0 0
    %426 = vmatpush1.bf16.msra.mxu0 %v410
    %427 = vmatprep.subr.bf16.mxu0 0
    %428 = vmatpush1.bf16.msra.mxu0 %v409
    %429 = vmatprep.subr.bf16.mxu0 0
    %430 = vmatpush1.bf16.msra.mxu0 %v408
    %431 = vmatprep.subr.bf16.mxu0 0
    %432 = vmatpush1.bf16.msra.mxu0 %v407
    %433 = vmatprep.subr.bf16.mxu0 0
    %434 = vmatpush1.bf16.msra.mxu0 %v406
    %435 = vmatprep.subr.bf16.mxu0 0
    %436 = vmatpush1.bf16.msra.mxu0 %v405
    %437 = vmatprep.subr.bf16.mxu0 0
    %438 = vmatpush2.bf16.msra.mxu0 0
    %439 = vmatprep.subr.bf16.mxu0 0
    %440 = vmatpush2.bf16.msra.mxu0 0
    %441 = vmatprep.subr.bf16.mxu0 0
    %442 = vmatpush2.bf16.msra.mxu0 0
    %443 = vmatprep.subr.bf16.mxu0 0
    %444 = vmatpush2.bf16.msra.mxu0 0
    %445 = vmatprep.subr.bf16.mxu0 0
    %446 = vmatpush2.bf16.msra.mxu0 0
    %447 = vmatprep.subr.bf16.mxu0 0
    %448 = vmatpush2.bf16.msra.mxu0 0
    %449 = vmatprep.subr.bf16.mxu0 0
    %450 = vmatpush2.bf16.msra.mxu0 0
    %451 = vmatprep.subr.bf16.mxu0 0
    %452 = vmatpush2.bf16.msra.mxu0 0
    %453 = vmatprep.mubr.bf16.mxu0 0
    %454 = vmatmul.mubr.bf16.gmra.mxu0 %v352
    %v455 = vpop.f32.mrf.mxu0
    %v456 = vadd.f32 0.0, %v455
    %v457 = vpop.f32.mrf.mxu0
    %v458 = vpop.f32.mrf.mxu0
    %v459 = vadd.f32 0.0, %v458
    %v460 = vpop.f32.mrf.mxu0
    %461 = vmatprep.mubr.bf16.mxu0 0
    %462 = vmatmul.mubr.bf16.gmra.mxu0 %v353
    %v463 = vpop.f32.mrf.mxu0
    %v464 = vadd.f32 0.0, %v463
    %v465 = vpop.f32.mrf.mxu0
    %v466 = vpop.f32.mrf.mxu0
    %v467 = vadd.f32 0.0, %v466
    %v468 = vpop.f32.mrf.mxu0
    %469 = vmatprep.mubr.bf16.mxu0 0
    %470 = vmatmul.mubr.bf16.gmra.mxu0 %v354
    %v471 = vpop.f32.mrf.mxu0
    %v472 = vadd.f32 0.0, %v471
    %v473 = vpop.f32.mrf.mxu0
    %v474 = vpop.f32.mrf.mxu0
    %v475 = vadd.f32 0.0, %v474
    %v476 = vpop.f32.mrf.mxu0
    %477 = vmatprep.mubr.bf16.mxu0 0
    %478 = vmatmul.mubr.bf16.gmra.mxu0 %v355
    %v479 = vpop.f32.mrf.mxu0
    %v480 = vadd.f32 0.0, %v479
    %v481 = vpop.f32.mrf.mxu0
    %v482 = vpop.f32.mrf.mxu0
    %v483 = vadd.f32 0.0, %v482
    %v484 = vpop.f32.mrf.mxu0
    %485 = vdwg.mxu0
    %v486 = vpack.c.bf16 %v459, %v456
    %v487 = vpack.c.bf16 %v467, %v464
    %v488 = vpack.c.bf16 %v475, %v472
    %v489 = vpack.c.bf16 %v483, %v480
    %s490 = scalar_lea.vmem %s3, 1
    %v491 = vld [vmem:[%s490] sm:$0x1]
    %v493 = vlaneseq
    %v494 = vshrl.u32 %v493, 7
    %v495 = vsub.s32 0, %v494
    %v496 = vrot.slane %v491, %v495
    %498 = vmatprep.subr.bf16.mxu0 0
    %499 = vmatpush1.bf16.msra.mxu0 0
    %500 = vmatprep.subr.bf16.mxu0 0
    %501 = vmatpush1.bf16.msra.mxu0 0
    %502 = vmatprep.subr.bf16.mxu0 0
    %503 = vmatpush1.bf16.msra.mxu0 0
    %504 = vmatprep.subr.bf16.mxu0 0
    %505 = vmatpush1.bf16.msra.mxu0 0
    %506 = vmatprep.subr.bf16.mxu0 0
    %507 = vmatpush1.bf16.msra.mxu0 %v489
    %508 = vmatprep.subr.bf16.mxu0 0
    %509 = vmatpush1.bf16.msra.mxu0 %v488
    %510 = vmatprep.subr.bf16.mxu0 0
    %511 = vmatpush1.bf16.msra.mxu0 %v487
    %512 = vmatprep.subr.bf16.mxu0 0
    %513 = vmatpush1.bf16.msra.mxu0 %v486
    %514 = vmatprep.subr.bf16.mxu0 0
    %515 = vmatpush2.bf16.msra.mxu0 0
    %516 = vmatprep.subr.bf16.mxu0 0
    %517 = vmatpush2.bf16.msra.mxu0 0
    %518 = vmatprep.subr.bf16.mxu0 0
    %519 = vmatpush2.bf16.msra.mxu0 0
    %520 = vmatprep.subr.bf16.mxu0 0
    %521 = vmatpush2.bf16.msra.mxu0 0
    %522 = vmatprep.subr.bf16.mxu0 0
    %523 = vmatpush2.bf16.msra.mxu0 0
    %524 = vmatprep.subr.bf16.mxu0 0
    %525 = vmatpush2.bf16.msra.mxu0 0
    %526 = vmatprep.subr.bf16.mxu0 0
    %527 = vmatpush2.bf16.msra.mxu0 0
    %528 = vmatprep.subr.bf16.mxu0 0
    %529 = vmatpush2.bf16.msra.mxu0 0
    %530 = vmatprep.mubr.bf16.mxu0 0
    %531 = vmatmul.mubr.bf16.gmra.mxu0 %v272
    %v532 = vpop.f32.mrf.mxu0
    %v533 = vadd.f32 %v496, %v532
    %v534 = vpop.f32.mrf.mxu0
    %v535 = vpop.f32.mrf.mxu0
    %v536 = vadd.f32 %v496, %v535
    %v537 = vpop.f32.mrf.mxu0
    %538 = vmatprep.mubr.bf16.mxu0 0
    %539 = vmatmul.mubr.bf16.gmra.mxu0 %v275
    %v540 = vpop.f32.mrf.mxu0
    %v541 = vadd.f32 %v496, %v540
    %v542 = vpop.f32.mrf.mxu0
    %v543 = vpop.f32.mrf.mxu0
    %v544 = vadd.f32 %v496, %v543
    %v545 = vpop.f32.mrf.mxu0
    %546 = vmatprep.mubr.bf16.mxu0 0
    %547 = vmatmul.mubr.bf16.gmra.mxu0 %v278
    %v548 = vpop.f32.mrf.mxu0
    %v549 = vadd.f32 %v496, %v548
    %v550 = vpop.f32.mrf.mxu0
    %v551 = vpop.f32.mrf.mxu0
    %v552 = vadd.f32 %v496, %v551
    %v553 = vpop.f32.mrf.mxu0
    %554 = vmatprep.mubr.bf16.mxu0 0
    %555 = vmatmul.mubr.bf16.gmra.mxu0 %v281
    %v556 = vpop.f32.mrf.mxu0
    %v557 = vadd.f32 %v496, %v556
    %v558 = vpop.f32.mrf.mxu0
    %v559 = vpop.f32.mrf.mxu0
    %v560 = vadd.f32 %v496, %v559
    %v561 = vpop.f32.mrf.mxu0
    %562 = vdwg.mxu0
    %v563 = vpack.c.bf16 %v536, %v533
    %v564 = vpack.c.bf16 %v544, %v541
    %v565 = vpack.c.bf16 %v552, %v549
    %v566 = vpack.c.bf16 %v560, %v557
    %v567 = vtanh.bf16.pop %v563
    %v568 = vtanh.bf16.pop %v564
    %v569 = vtanh.bf16.pop %v565
    %v570 = vtanh.bf16.pop %v566
    %s571 = scalar_lea.vmem %s2, 128
    %v572 = vld [vmem:[%s571] sm:$0xf]
    %v573 = vld [vmem:[%s571 + $0x4] sm:$0xf]
    %v574 = vld [vmem:[%s571 + $0x8] sm:$0xf]
    %v575 = vld [vmem:[%s571 + $0xc] sm:$0xf]
    %v576 = vld [vmem:[%s571 + $0x10] sm:$0xf]
    %v577 = vld [vmem:[%s571 + $0x14] sm:$0xf]
    %v578 = vld [vmem:[%s571 + $0x18] sm:$0xf]
    %v579 = vld [vmem:[%s571 + $0x1c] sm:$0xf]
    %v580 = vld [vmem:[%s571 + $0x20] sm:$0xf]
    %v581 = vld [vmem:[%s571 + $0x24] sm:$0xf]
    %v582 = vld [vmem:[%s571 + $0x28] sm:$0xf]
    %v583 = vld [vmem:[%s571 + $0x2c] sm:$0xf]
    %v584 = vld [vmem:[%s571 + $0x30] sm:$0xf]
    %v585 = vld [vmem:[%s571 + $0x34] sm:$0xf]
    %v586 = vld [vmem:[%s571 + $0x38] sm:$0xf]
    %v587 = vld [vmem:[%s571 + $0x3c] sm:$0xf]
    %v604 = vunpack.c.l.b16 %v572
    %v605 = vunpack.c.l.b16 %v573
    %v606 = vunpack.c.l.b16 %v574
    %v607 = vunpack.c.l.b16 %v575
    %v608 = vunpack.c.l.b16 %v576
    %v609 = vunpack.c.l.b16 %v577
    %v610 = vunpack.c.l.b16 %v578
    %v611 = vunpack.c.l.b16 %v579
    %v612 = vunpack.c.l.b16 %v580
    %v613 = vunpack.c.l.b16 %v581
    %v614 = vunpack.c.l.b16 %v582
    %v615 = vunpack.c.l.b16 %v583
    %v616 = vunpack.c.l.b16 %v584
    %v617 = vunpack.c.l.b16 %v585
    %v618 = vunpack.c.l.b16 %v586
    %v619 = vunpack.c.l.b16 %v587
    %v620 = vpack.c.b16 %v605, %v604
    %v621 = vpack.c.b16 %v607, %v606
    %v622 = vpack.c.b16 %v609, %v608
    %v623 = vpack.c.b16 %v611, %v610
    %v624 = vpack.c.b16 %v613, %v612
    %v625 = vpack.c.b16 %v615, %v614
    %v626 = vpack.c.b16 %v617, %v616
    %v627 = vpack.c.b16 %v619, %v618
    %636 = vmatprep.subr.bf16.mxu0 0
    %637 = vmatpush1.bf16.msra.mxu0 %v627
    %638 = vmatprep.subr.bf16.mxu0 0
    %639 = vmatpush1.bf16.msra.mxu0 %v626
    %640 = vmatprep.subr.bf16.mxu0 0
    %641 = vmatpush1.bf16.msra.mxu0 %v625
    %642 = vmatprep.subr.bf16.mxu0 0
    %643 = vmatpush1.bf16.msra.mxu0 %v624
    %644 = vmatprep.subr.bf16.mxu0 0
    %645 = vmatpush1.bf16.msra.mxu0 %v623
    %646 = vmatprep.subr.bf16.mxu0 0
    %647 = vmatpush1.bf16.msra.mxu0 %v622
    %648 = vmatprep.subr.bf16.mxu0 0
    %649 = vmatpush1.bf16.msra.mxu0 %v621
    %650 = vmatprep.subr.bf16.mxu0 0
    %651 = vmatpush1.bf16.msra.mxu0 %v620
    %652 = vmatprep.subr.bf16.mxu0 0
    %653 = vmatpush2.bf16.msra.mxu0 0
    %654 = vmatprep.subr.bf16.mxu0 0
    %655 = vmatpush2.bf16.msra.mxu0 0
    %656 = vmatprep.subr.bf16.mxu0 0
    %657 = vmatpush2.bf16.msra.mxu0 0
    %658 = vmatprep.subr.bf16.mxu0 0
    %659 = vmatpush2.bf16.msra.mxu0 0
    %660 = vmatprep.subr.bf16.mxu0 0
    %661 = vmatpush2.bf16.msra.mxu0 0
    %662 = vmatprep.subr.bf16.mxu0 0
    %663 = vmatpush2.bf16.msra.mxu0 0
    %664 = vmatprep.subr.bf16.mxu0 0
    %665 = vmatpush2.bf16.msra.mxu0 0
    %666 = vmatprep.subr.bf16.mxu0 0
    %667 = vmatpush2.bf16.msra.mxu0 0
    %668 = vmatprep.mubr.bf16.mxu0 0
    %669 = vmatmul.mubr.bf16.gmra.mxu0 %v567
    %v670 = vpop.f32.mrf.mxu0
    %v671 = vadd.f32 0.0, %v670
    %v672 = vpop.f32.mrf.mxu0
    %v673 = vpop.f32.mrf.mxu0
    %v674 = vadd.f32 0.0, %v673
    %v675 = vpop.f32.mrf.mxu0
    %676 = vmatprep.mubr.bf16.mxu0 0
    %677 = vmatmul.mubr.bf16.gmra.mxu0 %v568
    %v678 = vpop.f32.mrf.mxu0
    %v679 = vadd.f32 0.0, %v678
    %v680 = vpop.f32.mrf.mxu0
    %v681 = vpop.f32.mrf.mxu0
    %v682 = vadd.f32 0.0, %v681
    %v683 = vpop.f32.mrf.mxu0
    %684 = vmatprep.mubr.bf16.mxu0 0
    %685 = vmatmul.mubr.bf16.gmra.mxu0 %v569
    %v686 = vpop.f32.mrf.mxu0
    %v687 = vadd.f32 0.0, %v686
    %v688 = vpop.f32.mrf.mxu0
    %v689 = vpop.f32.mrf.mxu0
    %v690 = vadd.f32 0.0, %v689
    %v691 = vpop.f32.mrf.mxu0
    %692 = vmatprep.mubr.bf16.mxu0 0
    %693 = vmatmul.mubr.bf16.gmra.mxu0 %v570
    %v694 = vpop.f32.mrf.mxu0
    %v695 = vadd.f32 0.0, %v694
    %v696 = vpop.f32.mrf.mxu0
    %v697 = vpop.f32.mrf.mxu0
    %v698 = vadd.f32 0.0, %v697
    %v699 = vpop.f32.mrf.mxu0
    %700 = vdwg.mxu0
    %v701 = vpack.c.bf16 %v674, %v671
    %v702 = vpack.c.bf16 %v682, %v679
    %v703 = vpack.c.bf16 %v690, %v687
    %v704 = vpack.c.bf16 %v698, %v695
    %s705 = scalar_lea.vmem %s3, 2
    %v706 = vld [vmem:[%s705] sm:$0x1]
    %v708 = vlaneseq
    %v709 = vshrl.u32 %v708, 7
    %v710 = vsub.s32 0, %v709
    %v711 = vrot.slane %v706, %v710
    %713 = vmatprep.subr.bf16.mxu0 0
    %714 = vmatpush1.bf16.msra.mxu0 0
    %715 = vmatprep.subr.bf16.mxu0 0
    %716 = vmatpush1.bf16.msra.mxu0 0
    %717 = vmatprep.subr.bf16.mxu0 0
    %718 = vmatpush1.bf16.msra.mxu0 0
    %719 = vmatprep.subr.bf16.mxu0 0
    %720 = vmatpush1.bf16.msra.mxu0 0
    %721 = vmatprep.subr.bf16.mxu0 0
    %722 = vmatpush1.bf16.msra.mxu0 %v704
    %723 = vmatprep.subr.bf16.mxu0 0
    %724 = vmatpush1.bf16.msra.mxu0 %v703
    %725 = vmatprep.subr.bf16.mxu0 0
    %726 = vmatpush1.bf16.msra.mxu0 %v702
    %727 = vmatprep.subr.bf16.mxu0 0
    %728 = vmatpush1.bf16.msra.mxu0 %v701
    %729 = vmatprep.subr.bf16.mxu0 0
    %730 = vmatpush2.bf16.msra.mxu0 0
    %731 = vmatprep.subr.bf16.mxu0 0
    %732 = vmatpush2.bf16.msra.mxu0 0
    %733 = vmatprep.subr.bf16.mxu0 0
    %734 = vmatpush2.bf16.msra.mxu0 0
    %735 = vmatprep.subr.bf16.mxu0 0
    %736 = vmatpush2.bf16.msra.mxu0 0
    %737 = vmatprep.subr.bf16.mxu0 0
    %738 = vmatpush2.bf16.msra.mxu0 0
    %739 = vmatprep.subr.bf16.mxu0 0
    %740 = vmatpush2.bf16.msra.mxu0 0
    %741 = vmatprep.subr.bf16.mxu0 0
    %742 = vmatpush2.bf16.msra.mxu0 0
    %743 = vmatprep.subr.bf16.mxu0 0
    %744 = vmatpush2.bf16.msra.mxu0 0
    %745 = vmatprep.mubr.bf16.mxu0 0
    %746 = vmatmul.mubr.bf16.gmra.mxu0 %v272
    %v747 = vpop.f32.mrf.mxu0
    %v748 = vadd.f32 %v711, %v747
    %v749 = vpop.f32.mrf.mxu0
    %v750 = vpop.f32.mrf.mxu0
    %v751 = vadd.f32 %v711, %v750
    %v752 = vpop.f32.mrf.mxu0
    %753 = vmatprep.mubr.bf16.mxu0 0
    %754 = vmatmul.mubr.bf16.gmra.mxu0 %v275
    %v755 = vpop.f32.mrf.mxu0
    %v756 = vadd.f32 %v711, %v755
    %v757 = vpop.f32.mrf.mxu0
    %v758 = vpop.f32.mrf.mxu0
    %v759 = vadd.f32 %v711, %v758
    %v760 = vpop.f32.mrf.mxu0
    %761 = vmatprep.mubr.bf16.mxu0 0
    %762 = vmatmul.mubr.bf16.gmra.mxu0 %v278
    %v763 = vpop.f32.mrf.mxu0
    %v764 = vadd.f32 %v711, %v763
    %v765 = vpop.f32.mrf.mxu0
    %v766 = vpop.f32.mrf.mxu0
    %v767 = vadd.f32 %v711, %v766
    %v768 = vpop.f32.mrf.mxu0
    %769 = vmatprep.mubr.bf16.mxu0 0
    %770 = vmatmul.mubr.bf16.gmra.mxu0 %v281
    %v771 = vpop.f32.mrf.mxu0
    %v772 = vadd.f32 %v711, %v771
    %v773 = vpop.f32.mrf.mxu0
    %v774 = vpop.f32.mrf.mxu0
    %v775 = vadd.f32 %v711, %v774
    %v776 = vpop.f32.mrf.mxu0
    %777 = vdwg.mxu0
    %778 = vst [vmem:[#allocation4] sm:$0xff] %v748
    %779 = vst [vmem:[#allocation4 + $0x8] sm:$0xff] %v751
    %780 = vst [vmem:[#allocation4 + $0x10] sm:$0xff] %v756
    %781 = vst [vmem:[#allocation4 + $0x18] sm:$0xff] %v759
    %782 = vst [vmem:[#allocation4 + $0x20] sm:$0xff] %v764
    %783 = vst [vmem:[#allocation4 + $0x28] sm:$0xff] %v767
    %784 = vst [vmem:[#allocation4 + $0x30] sm:$0xff] %v772
    %785 = vst [vmem:[#allocation4 + $0x38] sm:$0xff] %v775
    // Predicated region
    $region48: #{_gcn_forward_padded.1} parent=1 // pred_check
      _
    $region49: #{_gcn_forward_padded.1} parent=1 // pred_check_branch
      %787 = sbr.rel (0) target = $region51
    $region50: #{_gcn_forward_padded.1} parent=1 // pred_region
      %s789 = ssub.s32 1024, 1024
      %790 = vsyncadd [#allocation5], %s789
      %s791 = sshll.u32 [#allocation4], 4
      %s792 = int_to_ptr.vmem [resolvable:$true] %s791
      %797 = dma.vmem_to_hbm [thread:$0]  %s792, 1024, %s4, [#allocation5], 128, 128, 8
    $region51: #{_gcn_forward_padded.1} parent=1 // pred_fallthru
      _
    // Predicated region
    $region52: #{_gcn_forward_padded.1} parent=1 // pred_check
      _
    $region53: #{_gcn_forward_padded.1} parent=1 // pred_check_branch
      %799 = sbr.rel (0) target = $region55
    $region54: #{_gcn_forward_padded.1} parent=1 // pred_region
      %800 = dma.done [#allocation5], 1024
    $region55: #{_gcn_forward_padded.1} parent=1 // pred_fallthru
      _
    %801 = vsyncpa [#allocation5], 1
  %802 = vsyncmov [#allocation3]
  %s803 = vpop.sfrf %802
  %p804 = scmp.eq.s32.totalorder %s803, 0
  %p805 = pneg %p804
  %807 = shalt.err (%p805)

</llo_original>
